<compile_context>
chip_gen: v7x
topology: tpu7x:2x2x1
jax: 0.10.0
libtpu: 0.0.40
codegen_flags: <defaults>
</compile_context>

<pallas_src>
import functools

import jax
import jax.numpy as jnp
import numpy as np
from jax.experimental import pallas as pl
from jax.experimental.pallas import tpu as pltpu


_Q_DTYPE = jnp.bfloat16      # HBM storage dtype of the teacher softmax q
_LANES = 128                 # lane tiling
_F32_SUBLANES = 8
_BF16_SUBLANES = 16


def _sublane_multiple(dtype):
    return _BF16_SUBLANES if np.dtype(dtype).itemsize == 2 else _F32_SUBLANES


def _pick_lane_tile(out_dim, max_lanes):
    """Largest multiple of 128 that divides out_dim and is <= max_lanes."""
    max_lanes = max(_LANES, (int(max_lanes) // _LANES) * _LANES)
    if out_dim <= max_lanes:
        return out_dim
    best = _LANES
    for t in range(_LANES, max_lanes + 1, _LANES):
        if out_dim % t == 0:
            best = t
    return best


def _pick_row_tile(rows, sub, max_rows):
    """Largest multiple of `sub` dividing `rows`, <= max_rows (else full)."""
    if rows <= max_rows or rows % sub != 0:
        return rows                      # full-extent block is always legal
    best = None
    for r in range(sub, int(max_rows) + 1, sub):
        if rows % r == 0:
            best = r
    return best if best is not None else rows


def _vmem_limit_bytes(block_bytes):
    """Scoped-VMEM limit: double-buffered blocks + headroom, under physical."""
    needed = int(6 * block_bytes)        # 2x double-buffering * 3x f32 temps
    try:
        cap = int(pltpu.get_tpu_info().vmem_capacity_bytes)
    except Exception:                    # conservative: v7x physical per-TC
        cap = 64 * 2**20
    return max(32 * 2**20, min(needed, cap - 8 * 2**20))


# ---------------------------------------------------------------------------
# Kernel 1: teacher softmax (row-tiled, bf16 out) + fused resident batch sum
# ---------------------------------------------------------------------------
def _teacher_kernel(inv_temp_ref, teacher_ref, surr_ref, q_ref, tsum_ref):
    i = pl.program_id(0)
    t = teacher_ref[...].astype(jnp.float32)            # (R, out_dim), f32 math

    # Fused surrogate batch-sum: accumulated into a resident (1, out_dim)
    # output block — no second HBM pass over teacher_output for the EMA.
    @pl.when(i == 0)
    def _():
        tsum_ref[...] = jnp.zeros(tsum_ref.shape, tsum_ref.dtype)
    tsum_ref[...] += jnp.sum(t, axis=0, keepdims=True)

    inv_temp = inv_temp_ref[0]                           # scalar from SMEM
    logits = (t - surr_ref[...].astype(jnp.float32)) * inv_temp
    e = jnp.exp(logits - jnp.max(logits, axis=-1, keepdims=True))
    q = e * pl.reciprocal(jnp.sum(e, axis=-1, keepdims=True))   # exact recip
    q_ref[...] = q.astype(q_ref.dtype)                   # bf16 HBM residency


def _teacher_softmax_and_sum(teacher_output, surrogate, inv_temp_arr,
                             rows_per_tile):
    tb, out_dim = teacher_output.shape
    R = rows_per_tile
    grid_spec = pltpu.PrefetchScalarGridSpec(
        num_scalar_prefetch=1,
        grid=(tb // R,),
        in_specs=[
            pl.BlockSpec((R, out_dim), lambda i, it: (i, 0)),   # teacher rows
            pl.BlockSpec((1, out_dim), lambda i, it: (0, 0)),   # surrogate
        ],
        out_specs=[
            pl.BlockSpec((R, out_dim), lambda i, it: (i, 0)),   # q = softmax
            pl.BlockSpec((1, out_dim), lambda i, it: (0, 0)),   # resident sum
        ],
    )
    block_bytes = (R * out_dim * teacher_output.dtype.itemsize
                   + out_dim * 4
                   + R * out_dim * np.dtype(_Q_DTYPE).itemsize
                   + out_dim * 4)
    return pl.pallas_call(
        _teacher_kernel,
        grid_spec=grid_spec,
        out_shape=(jax.ShapeDtypeStruct((tb, out_dim), _Q_DTYPE),
                   jax.ShapeDtypeStruct((1, out_dim), jnp.float32)),
        compiler_params=pltpu.CompilerParams(
            dimension_semantics=("arbitrary",),
            vmem_limit_bytes=_vmem_limit_bytes(block_bytes)),
    )(inv_temp_arr, teacher_output, surrogate)


# ---------------------------------------------------------------------------
# Kernel 2: per-crop cross-entropy, out_dim-tiled with online logsumexp
# ---------------------------------------------------------------------------
def _loss_kernel(student_ref, q_ref, out_ref, m_ref, l_ref, dot_ref, *,
                 inv_student_temp, b):
    v = pl.program_id(0)
    k = pl.program_id(1)

    @pl.when(k == 0)
    def _():
        m_ref[...] = jnp.full(m_ref.shape, -jnp.inf, dtype=m_ref.dtype)
        l_ref[...] = jnp.zeros(l_ref.shape, l_ref.dtype)
        dot_ref[...] = jnp.zeros(dot_ref.shape, dot_ref.dtype)

    s = student_ref[...].astype(jnp.float32) * inv_student_temp   # (b, tk)

    # Online logsumexp over the (tiled) out_dim axis.
    m_old = m_ref[...]
    m_new = jnp.maximum(m_old, jnp.max(s, axis=-1, keepdims=True))
    l_ref[...] = (l_ref[...] * jnp.exp(m_old - m_new)
                  + jnp.sum(jnp.exp(s - m_new), axis=-1, keepdims=True))
    m_ref[...] = m_new

    # Diagonal-term masks (skip iq == v), folded into ONE combined teacher row
    # so both cross-entropies share a single lane reduction per tile.
    w0 = (v != 0).astype(jnp.float32)
    w1 = (v != 1).astype(jnp.float32)
    q0 = q_ref[pl.ds(0, b), :].astype(jnp.float32)       # teacher crop 0 tile
    q1 = q_ref[pl.ds(b, b), :].astype(jnp.float32)       # teacher crop 1 tile
    dot_ref[...] += jnp.sum((w0 * q0 + w1 * q1) * s, axis=-1, keepdims=True)

    @pl.when(k == pl.num_programs(1) - 1)
    def _():
        # ce(q, s) = lse(s) - sum_d(q_d * s_d)  (softmax rows of q sum to 1)
        lse = m_ref[...] + jnp.log(l_ref[...])            # (b, 1)
        inv_b = 1.0 / b
        loss_v = ((w0 + w1) * jnp.sum(lse) * inv_b
                  - jnp.sum(dot_ref[...]) * inv_b)
        # One lane-dense write per crop; the v axis stays "parallel".
        out_ref[...] = jnp.broadcast_to(loss_v, out_ref.shape)


def _per_crop_losses(student_output, q, *, ncrops, student_temp, lane_tile):
    total_s, out_dim = student_output.shape
    b = total_s // ncrops
    tb = q.shape[0]
    tk = lane_tile
    n_k = out_dim // tk

    kernel = functools.partial(
        _loss_kernel, inv_student_temp=1.0 / float(student_temp), b=int(b))

    grid_spec = pltpu.PrefetchScalarGridSpec(
        num_scalar_prefetch=0,
        grid=(ncrops, n_k),
        in_specs=[
            pl.BlockSpec((b, tk), lambda v, k: (v, k)),    # student crop tile
            pl.BlockSpec((tb, tk), lambda v, k: (0, k)),   # both teacher q's
        ],
        out_specs=pl.BlockSpec((1, 8, 128), lambda v, k: (v, 0, 0)),
        scratch_shapes=[pltpu.VMEM((b, 1), jnp.float32),   # running max
                        pltpu.VMEM((b, 1), jnp.float32),   # running exp-sum
                        pltpu.VMEM((b, 1), jnp.float32)],  # running sum(q*s)
    )
    block_bytes = (b * tk * student_output.dtype.itemsize
                   + tb * tk * np.dtype(_Q_DTYPE).itemsize
                   + 8 * 128 * 4)
    out = pl.pallas_call(
        kernel,
        grid_spec=grid_spec,
        out_shape=jax.ShapeDtypeStruct((ncrops, 8, 128), jnp.float32),
        compiler_params=pltpu.CompilerParams(
            dimension_semantics=("parallel", "arbitrary"),
            vmem_limit_bytes=_vmem_limit_bytes(block_bytes)),
    )(student_output, q)
    return out[:, 0, 0]                                    # (ncrops,)


# ---------------------------------------------------------------------------
# Forward wrapper (jitted)
# ---------------------------------------------------------------------------
@functools.partial(jax.jit,
                   static_argnames=("student_temp", "ncrops",
                                    "lane_tile", "teacher_rows"))
def dino_forward(student_output, teacher_output, surrogate, inv_teacher_temp,
                 *, student_temp, ncrops, lane_tile=None, teacher_rows=None):
    total_s, out_dim = student_output.shape
    total_t, _ = teacher_output.shape
    assert ncrops >= 2 and total_s % ncrops == 0 and total_t % 2 == 0
    b = total_s // ncrops
    assert total_t // 2 == b, "teacher/student batch mismatch"
    assert out_dim % _LANES == 0, "out_dim must be a multiple of 128 (lanes)"
    assert b % _sublane_multiple(student_output.dtype) == 0, (
        "per-crop batch must be a multiple of the sublane packing")

    # out_dim tile of the loss kernel (online-logsumexp CE over this axis).
    # Default cap of 2048 lanes fits all generations; v5e/v6e (128 MiB VMEM)
    # could go larger, v7x (64 MiB) should stay modest.
    if lane_tile is None:
        lane_tile = _pick_lane_tile(out_dim, 2048)
    assert out_dim % lane_tile == 0 and lane_tile % _LANES == 0

    # Teacher row tile (multiple of 16 so the bf16 q output block is legal);
    # default ~2 MiB of f32 rows per tile.
    if teacher_rows is None:
        teacher_rows = max(_BF16_SUBLANES,
                           ((2 * 2**20) // (out_dim * 4))
                           // _BF16_SUBLANES * _BF16_SUBLANES)
    rows_per_tile = _pick_row_tile(total_t, _BF16_SUBLANES, teacher_rows)
    assert total_t % rows_per_tile == 0

    inv_temp_arr = jnp.asarray(inv_teacher_temp, dtype=jnp.float32).reshape((1,))

    q, teacher_sum = _teacher_softmax_and_sum(
        teacher_output, surrogate, inv_temp_arr, rows_per_tile)
    partials = _per_crop_losses(student_output, q, ncrops=ncrops,
                                student_temp=student_temp, lane_tile=lane_tile)
    total_loss = jnp.sum(partials) / float(2 * (ncrops - 1))
    return total_loss, teacher_sum


class DINOLossJax:
    """JAX/Pallas port of the PyTorch DINOLoss module (single device)."""

    def __init__(self, out_dim, ncrops, warmup_teacher_temp, teacher_temp,
                 warmup_teacher_temp_epochs, nepochs,
                 student_temp=0.1, surrogate_momentum=0.9):
        self.student_temp = student_temp
        self.surrogate_momentum = surrogate_momentum
        self.ncrops = ncrops
        # buffer: zeros(1, out_dim), deterministic init as in the module
        self.surrogate = jnp.zeros((1, out_dim), dtype=jnp.float32)
        self.teacher_temp_schedule = np.concatenate((
            np.linspace(warmup_teacher_temp, teacher_temp,
                        warmup_teacher_temp_epochs),
            np.ones(nepochs - warmup_teacher_temp_epochs) * teacher_temp,
        ))

    def __call__(self, student_output, teacher_output, epoch,
                 lane_tile=None, teacher_rows=None):
        temp = float(self.teacher_temp_schedule[epoch])
        loss, teacher_sum = dino_forward(
            student_output, teacher_output, self.surrogate, 1.0 / temp,
            student_temp=self.student_temp, ncrops=self.ncrops,
            lane_tile=lane_tile, teacher_rows=teacher_rows)
        self._update_surrogate(teacher_sum, teacher_output.shape[0])
        return loss

    def _update_surrogate(self, teacher_sum, n_rows):
        # dist.all_reduce with world_size == 1 is the identity (single device).
        # TODO(synk): multi-device training would psum teacher_sum here.
        world_size = 1
        batch_surrogate = teacher_sum / (n_rows * world_size)
        self.surrogate = (self.surrogate * self.surrogate_momentum
                          + batch_surrogate * (1.0 - self.surrogate_momentum))


# ---------------------------------------------------------------------------
# Pure-JAX reference (mirrors the PyTorch module, all-f32)
# ---------------------------------------------------------------------------
def _reference_loss(student_output, teacher_output, surrogate, teacher_temp,
                    student_temp, ncrops):
    student_out = student_output / student_temp
    student_chunks = jnp.split(student_out, ncrops, axis=0)
    teacher_out = jax.nn.softmax((teacher_output - surrogate) / teacher_temp,
                                 axis=-1)
    teacher_chunks = jnp.split(teacher_out, 2, axis=0)
    total_loss = 0.0
    n_loss_terms = 0
    for iq, q in enumerate(teacher_chunks):
        for v in range(len(student_chunks)):
            if v == iq:
                continue
            loss = jnp.sum(-q * jax.nn.log_softmax(student_chunks[v], axis=-1),
                           axis=-1)
            total_loss += jnp.mean(loss)
            n_loss_terms += 1
    return total_loss / n_loss_terms


if __name__ == "__main__":
    out_dim = 256
    ncrops = 4
    batch = 16          # per-crop batch size
    epoch = 3

    key = jax.random.PRNGKey(0)
    ks, kt = jax.random.split(key)
    student_output = jax.random.normal(ks, (ncrops * batch, out_dim),
                                       dtype=jnp.float32)
    teacher_output = jax.random.normal(kt, (2 * batch, out_dim),
                                       dtype=jnp.float32)

    loss_mod = DINOLossJax(out_dim=out_dim, ncrops=ncrops,
                           warmup_teacher_temp=0.04, teacher_temp=0.07,
                           warmup_teacher_temp_epochs=10, nepochs=30)

    surrogate_before = loss_mod.surrogate
    # lane_tile=128 / teacher_rows=16 force multi-step grids so the online
    # logsumexp accumulation and the resident batch-sum accumulator are
    # exercised even at these toy shapes.
    loss = loss_mod(student_output, teacher_output, epoch,
                    lane_tile=128, teacher_rows=16)
    loss = jax.block_until_ready(loss)
    jax.block_until_ready(loss_mod.surrogate)

    # Cross-check against the all-f32 reference. Tolerance is loosened because
    # the kernel deliberately stores the teacher softmax q in bf16 in HBM
    # (bandwidth/VMEM optimization); that rounding dominates the difference.
    temp = float(loss_mod.teacher_temp_schedule[epoch])
    ref = _reference_loss(student_output, teacher_output, surrogate_before,
                          temp, loss_mod.student_temp, ncrops)
    ref = jax.block_until_ready(ref)
    assert np.allclose(np.asarray(loss), np.asarray(ref),
                       rtol=1e-2, atol=1e-2), (float(loss), float(ref))

    # Cross-check the fused surrogate EMA update (accumulated in f32).
    ref_bs = jnp.sum(teacher_output, axis=0, keepdims=True) / teacher_output.shape[0]
    ref_surr = (surrogate_before * loss_mod.surrogate_momentum
                + ref_bs * (1.0 - loss_mod.surrogate_momentum))
    assert np.allclose(np.asarray(loss_mod.surrogate), np.asarray(ref_surr),
                       rtol=1e-5, atol=1e-5)

    print("KERNEL_OK")
</pallas_src>

<mosaic_0001>
module attributes {stable_mosaic.version = 11 : i64} {
  func.func @_teacher_kernel(%arg0: i32, %arg1: memref<1xf32, #tpu.memory_space<smem>>, %arg2: memref<16x256xf32, #tpu.memory_space<vmem>>, %arg3: memref<1x256xf32, #tpu.memory_space<vmem>>, %arg4: memref<16x256xbf16, #tpu.memory_space<vmem>>, %arg5: memref<1x256xf32, #tpu.memory_space<vmem>>) attributes {dimension_semantics = [#tpu.dimension_semantics<arbitrary>], iteration_bounds = array<i64: 2>, scalar_prefetch = 1 : i64, scratch_operands = 0 : i64, tpu.core_type = #tpu.core_type<tc>, window_params = [{transform_indices = @transform_0, window_bounds = array<i64: 16, 256>}, {pipeline_mode = #tpu.pipeline_mode<synchronous>, transform_indices = @transform_1, window_bounds = array<i64: 1, 256>}, {transform_indices = @transform_2, window_bounds = array<i64: 16, 256>}, {pipeline_mode = #tpu.pipeline_mode<synchronous>, transform_indices = @transform_3, window_bounds = array<i64: 1, 256>}]} {
    %c0 = arith.constant 0 : index
    %c0_0 = arith.constant 0 : index
    %0 = vector.load %arg2[%c0, %c0_0] : memref<16x256xf32, #tpu.memory_space<vmem>>, vector<16x256xf32>
    %c0_i32 = arith.constant 0 : i32
    %1 = arith.cmpi eq, %arg0, %c0_i32 : i32
    %2 = arith.extui %1 : i1 to i32
    %c0_i32_1 = arith.constant 0 : i32
    %3 = arith.cmpi ne, %2, %c0_i32_1 : i32
    scf.if %3 {
      %cst_13 = arith.constant 0.000000e+00 : f32
      %27 = vector.broadcast %cst_13 : f32 to vector<1x256xf32>
      %c0_14 = arith.constant 0 : index
      %c0_15 = arith.constant 0 : index
      %28 = vector.load %arg5[%c0_14, %c0_15] : memref<1x256xf32, #tpu.memory_space<vmem>>, vector<1x256xf32>
      tpu.vector_store %arg5[%c0_14, %c0_15], %27 {strides = array<i32>} : memref<1x256xf32, #tpu.memory_space<vmem>>, vector<1x256xf32>,
    } else {
    }
    %c0_2 = arith.constant 0 : index
    %c0_3 = arith.constant 0 : index
    %4 = vector.load %arg5[%c0_2, %c0_3] : memref<1x256xf32, #tpu.memory_space<vmem>>, vector<1x256xf32>
    %cst = arith.constant dense<0.000000e+00> : vector<256xf32>
    %5 = vector.multi_reduction <add>, %0, %cst [0] : vector<16x256xf32> to vector<256xf32>
    %6 = vector.shape_cast %5 : vector<256xf32> to vector<1x256xf32>
    %7 = arith.addf %4, %6 : vector<1x256xf32>
    %c0_4 = arith.constant 0 : index
    %c0_5 = arith.constant 0 : index
    %8 = vector.load %arg5[%c0_4, %c0_5] : memref<1x256xf32, #tpu.memory_space<vmem>>, vector<1x256xf32>
    tpu.vector_store %arg5[%c0_4, %c0_5], %7 {strides = array<i32>} : memref<1x256xf32, #tpu.memory_space<vmem>>, vector<1x256xf32>,
    %c0_6 = arith.constant 0 : index
    %9 = memref.load %arg1[%c0_6] : memref<1xf32, #tpu.memory_space<smem>>
    %c0_7 = arith.constant 0 : index
    %c0_8 = arith.constant 0 : index
    %10 = vector.load %arg3[%c0_7, %c0_8] : memref<1x256xf32, #tpu.memory_space<vmem>>, vector<1x256xf32>
    %11 = vector.broadcast %10 : vector<1x256xf32> to vector<16x256xf32>
    %12 = arith.subf %0, %11 : vector<16x256xf32>
    %13 = vector.broadcast %9 : f32 to vector<16x256xf32>
    %14 = arith.mulf %12, %13 : vector<16x256xf32>
    %cst_9 = arith.constant dense<0xFF800000> : vector<16xf32>
    %15 = vector.multi_reduction <maximumf>, %14, %cst_9 [1] : vector<16x256xf32> to vector<16xf32>
    %16 = vector.shape_cast %15 : vector<16xf32> to vector<16x1xf32>
    %17 = vector.broadcast %16 : vector<16x1xf32> to vector<16x256xf32>
    %18 = arith.subf %14, %17 : vector<16x256xf32>
    %19 = math.exp %18 : vector<16x256xf32>
    %cst_10 = arith.constant dense<0.000000e+00> : vector<16xf32>
    %20 = vector.multi_reduction <add>, %19, %cst_10 [1] : vector<16x256xf32> to vector<16xf32>
    %21 = vector.shape_cast %20 : vector<16xf32> to vector<16x1xf32>
    %22 = tpu.reciprocal %21 : vector<16x1xf32> -> vector<16x1xf32>
    %23 = vector.broadcast %22 : vector<16x1xf32> to vector<16x256xf32>
    %24 = arith.mulf %19, %23 : vector<16x256xf32>
    %25 = arith.truncf %24 : vector<16x256xf32> to vector<16x256xbf16>
    %c0_11 = arith.constant 0 : index
    %c0_12 = arith.constant 0 : index
    %26 = vector.load %arg4[%c0_11, %c0_12] : memref<16x256xbf16, #tpu.memory_space<vmem>>, vector<16x256xbf16>
    tpu.vector_store %arg4[%c0_11, %c0_12], %25 {strides = array<i32>} : memref<16x256xbf16, #tpu.memory_space<vmem>>, vector<16x256xbf16>,
    return
  }
  func.func @transform_0(%arg0: i32, %arg1: memref<1xf32, #tpu.memory_space<smem>>) -> (i32, i32) {
    %c0_i32 = arith.constant 0 : i32
    %c0_i32_0 = arith.constant 0 : i32
    return %arg0, %c0_i32 : i32, i32
  }
  func.func @transform_1(%arg0: i32, %arg1: memref<1xf32, #tpu.memory_space<smem>>) -> (i32, i32) {
    %c0_i32 = arith.constant 0 : i32
    %c0_i32_0 = arith.constant 0 : i32
    %c0_i32_1 = arith.constant 0 : i32
    return %c0_i32, %c0_i32_0 : i32, i32
  }
  func.func @transform_2(%arg0: i32, %arg1: memref<1xf32, #tpu.memory_space<smem>>) -> (i32, i32) {
    %c0_i32 = arith.constant 0 : i32
    %c0_i32_0 = arith.constant 0 : i32
    return %arg0, %c0_i32 : i32, i32
  }
  func.func @transform_3(%arg0: i32, %arg1: memref<1xf32, #tpu.memory_space<smem>>) -> (i32, i32) {
    %c0_i32 = arith.constant 0 : i32
    %c0_i32_0 = arith.constant 0 : i32
    %c0_i32_1 = arith.constant 0 : i32
    return %c0_i32, %c0_i32_0 : i32, i32
  }
}

module attributes {stable_mosaic.version = 11 : i64} {
  func.func @_loss_kernel(%arg0: i32, %arg1: i32, %arg2: memref<16x128xf32, #tpu.memory_space<vmem>>, %arg3: memref<32x128xbf16, #tpu.memory_space<vmem>>, %arg4: memref<1x8x128xf32, #tpu.memory_space<vmem>>, %arg5: memref<16x1xf32, #tpu.memory_space<vmem>>, %arg6: memref<16x1xf32, #tpu.memory_space<vmem>>, %arg7: memref<16x1xf32, #tpu.memory_space<vmem>>) attributes {dimension_semantics = [#tpu.dimension_semantics<parallel>, #tpu.dimension_semantics<arbitrary>], iteration_bounds = array<i64: 4, 2>, scalar_prefetch = 0 : i64, scratch_operands = 3 : i64, tpu.core_type = #tpu.core_type<tc>, window_params = [{transform_indices = @transform_0, window_bounds = array<i64: 16, 128>}, {transform_indices = @transform_1, window_bounds = array<i64: 32, 128>}, {transform_indices = @transform_2, window_bounds = array<i64: 1, 8, 128>}]} {
    %c0_i32 = arith.constant 0 : i32
    %0 = arith.cmpi eq, %arg1, %c0_i32 : i32
    %1 = arith.extui %0 : i1 to i32
    %c0_i32_0 = arith.constant 0 : i32
    %2 = arith.cmpi ne, %1, %c0_i32_0 : i32
    scf.if %2 {
      %cst_23 = arith.constant 0xFF800000 : f32
      %46 = vector.broadcast %cst_23 : f32 to vector<16x1xf32>
      %c0_24 = arith.constant 0 : index
      %c0_25 = arith.constant 0 : index
      %47 = vector.load %arg5[%c0_24, %c0_25] : memref<16x1xf32, #tpu.memory_space<vmem>>, vector<16x1xf32>
      tpu.vector_store %arg5[%c0_24, %c0_25], %46 {strides = array<i32>} : memref<16x1xf32, #tpu.memory_space<vmem>>, vector<16x1xf32>,
      %cst_26 = arith.constant 0.000000e+00 : f32
      %48 = vector.broadcast %cst_26 : f32 to vector<16x1xf32>
      %c0_27 = arith.constant 0 : index
      %c0_28 = arith.constant 0 : index
      %49 = vector.load %arg6[%c0_27, %c0_28] : memref<16x1xf32, #tpu.memory_space<vmem>>, vector<16x1xf32>
      tpu.vector_store %arg6[%c0_27, %c0_28], %48 {strides = array<i32>} : memref<16x1xf32, #tpu.memory_space<vmem>>, vector<16x1xf32>,
      %cst_29 = arith.constant 0.000000e+00 : f32
      %50 = vector.broadcast %cst_29 : f32 to vector<16x1xf32>
      %c0_30 = arith.constant 0 : index
      %c0_31 = arith.constant 0 : index
      %51 = vector.load %arg7[%c0_30, %c0_31] : memref<16x1xf32, #tpu.memory_space<vmem>>, vector<16x1xf32>
      tpu.vector_store %arg7[%c0_30, %c0_31], %50 {strides = array<i32>} : memref<16x1xf32, #tpu.memory_space<vmem>>, vector<16x1xf32>,
    } else {
    }
    %c0 = arith.constant 0 : index
    %c0_1 = arith.constant 0 : index
    %3 = vector.load %arg2[%c0, %c0_1] : memref<16x128xf32, #tpu.memory_space<vmem>>, vector<16x128xf32>
    %cst = arith.constant 1.000000e+01 : f32
    %4 = vector.broadcast %cst : f32 to vector<16x128xf32>
    %5 = arith.mulf %3, %4 : vector<16x128xf32>
    %c0_2 = arith.constant 0 : index
    %c0_3 = arith.constant 0 : index
    %6 = vector.load %arg5[%c0_2, %c0_3] : memref<16x1xf32, #tpu.memory_space<vmem>>, vector<16x1xf32>
    %cst_4 = arith.constant dense<0xFF800000> : vector<16xf32>
    %7 = vector.multi_reduction <maximumf>, %5, %cst_4 [1] : vector<16x128xf32> to vector<16xf32>
    %8 = vector.shape_cast %7 : vector<16xf32> to vector<16x1xf32>
    %9 = arith.maximumf %6, %8 : vector<16x1xf32>
    %c0_5 = arith.constant 0 : index
    %c0_6 = arith.constant 0 : index
    %10 = vector.load %arg6[%c0_5, %c0_6] : memref<16x1xf32, #tpu.memory_space<vmem>>, vector<16x1xf32>
    %11 = arith.subf %6, %9 : vector<16x1xf32>
    %12 = math.exp %11 : vector<16x1xf32>
    %13 = arith.mulf %10, %12 : vector<16x1xf32>
    %14 = vector.broadcast %9 : vector<16x1xf32> to vector<16x128xf32>
    %15 = arith.subf %5, %14 : vector<16x128xf32>
    %16 = math.exp %15 : vector<16x128xf32>
    %cst_7 = arith.constant dense<0.000000e+00> : vector<16xf32>
    %17 = vector.multi_reduction <add>, %16, %cst_7 [1] : vector<16x128xf32> to vector<16xf32>
    %18 = vector.shape_cast %17 : vector<16xf32> to vector<16x1xf32>
    %19 = arith.addf %13, %18 : vector<16x1xf32>
    %c0_8 = arith.constant 0 : index
    %c0_9 = arith.constant 0 : index
    %20 = vector.load %arg6[%c0_8, %c0_9] : memref<16x1xf32, #tpu.memory_space<vmem>>, vector<16x1xf32>
    tpu.vector_store %arg6[%c0_8, %c0_9], %19 {strides = array<i32>} : memref<16x1xf32, #tpu.memory_space<vmem>>, vector<16x1xf32>,
    %c0_10 = arith.constant 0 : index
    %c0_11 = arith.constant 0 : index
    %21 = vector.load %arg5[%c0_10, %c0_11] : memref<16x1xf32, #tpu.memory_space<vmem>>, vector<16x1xf32>
    tpu.vector_store %arg5[%c0_10, %c0_11], %9 {strides = array<i32>} : memref<16x1xf32, #tpu.memory_space<vmem>>, vector<16x1xf32>,
    %c0_i32_12 = arith.constant 0 : i32
    %22 = arith.cmpi ne, %arg0, %c0_i32_12 : i32
    %23 = arith.extui %22 : i1 to i32
    %24 = arith.sitofp %23 : i32 to f32
    %c1_i32 = arith.constant 1 : i32
    %25 = arith.cmpi ne, %arg0, %c1_i32 : i32
    %26 = arith.extui %25 : i1 to i32
    %27 = arith.sitofp %26 : i32 to f32
    %c0_13 = arith.constant 0 : index
    %c0_14 = arith.constant 0 : index
    %28 = vector.load %arg3[%c0_13, %c0_14] : memref<32x128xbf16, #tpu.memory_space<vmem>>, vector<16x128xbf16>
    %29 = arith.extf %28 : vector<16x128xbf16> to vector<16x128xf32>
    %c16 = arith.constant 16 : index
    %c0_15 = arith.constant 0 : index
    %30 = vector.load %arg3[%c16, %c0_15] : memref<32x128xbf16, #tpu.memory_space<vmem>>, vector<16x128xbf16>
    %31 = arith.extf %30 : vector<16x128xbf16> to vector<16x128xf32>
    %c0_16 = arith.constant 0 : index
    %c0_17 = arith.constant 0 : index
    %32 = vector.load %arg7[%c0_16, %c0_17] : memref<16x1xf32, #tpu.memory_space<vmem>>, vector<16x1xf32>
    %33 = vector.broadcast %24 : f32 to vector<16x128xf32>
    %34 = arith.mulf %33, %29 : vector<16x128xf32>
    %35 = vector.broadcast %27 : f32 to vector<16x128xf32>
    %36 = arith.mulf %35, %31 : vector<16x128xf32>
    %37 = arith.addf %34, %36 : vector<16x128xf32>
    %38 = arith.mulf %37, %5 : vector<16x128xf32>
    %cst_18 = arith.constant dense<0.000000e+00> : vector<16xf32>
    %39 = vector.multi_reduction <add>, %38, %cst_18 [1] : vector<16x128xf32> to vector<16xf32>
    %40 = vector.shape_cast %39 : vector<16xf32> to vector<16x1xf32>
    %41 = arith.addf %32, %40 : vector<16x1xf32>
    %c0_19 = arith.constant 0 : index
    %c0_20 = arith.constant 0 : index
    %42 = vector.load %arg7[%c0_19, %c0_20] : memref<16x1xf32, #tpu.memory_space<vmem>>, vector<16x1xf32>
    tpu.vector_store %arg7[%c0_19, %c0_20], %41 {strides = array<i32>} : memref<16x1xf32, #tpu.memory_space<vmem>>, vector<16x1xf32>,
    %c1_i32_21 = arith.constant 1 : i32
    %43 = arith.cmpi eq, %arg1, %c1_i32_21 : i32
    %44 = arith.extui %43 : i1 to i32
    %c0_i32_22 = arith.constant 0 : i32
    %45 = arith.cmpi ne, %44, %c0_i32_22 : i32
    scf.if %45 {
      %c0_23 = arith.constant 0 : index
      %c0_24 = arith.constant 0 : index
      %46 = vector.load %arg5[%c0_23, %c0_24] : memref<16x1xf32, #tpu.memory_space<vmem>>, vector<16x1xf32>
      %c0_25 = arith.constant 0 : index
      %c0_26 = arith.constant 0 : index
      %47 = vector.load %arg6[%c0_25, %c0_26] : memref<16x1xf32, #tpu.memory_space<vmem>>, vector<16x1xf32>
      %48 = math.log %47 : vector<16x1xf32>
      %49 = arith.addf %46, %48 : vector<16x1xf32>
      %50 = arith.addf %24, %27 : f32
      %51 = vector.shape_cast %49 : vector<16x1xf32> to vector<1x16x1xf32>
      %cst_27 = arith.constant dense<0.000000e+00> : vector<1xf32>
      %52 = vector.multi_reduction <add>, %51, %cst_27 [1, 2] : vector<1x16x1xf32> to vector<1xf32>
      %53 = vector.shape_cast %52 : vector<1xf32> to vector<1x1x1xf32>
      %54 = vector.extract %53[0, 0, 0] : f32 from vector<1x1x1xf32>
      %55 = arith.mulf %50, %54 : f32
      %cst_28 = arith.constant 6.250000e-02 : f32
      %56 = arith.mulf %55, %cst_28 : f32
      %c0_29 = arith.constant 0 : index
      %c0_30 = arith.constant 0 : index
      %57 = vector.load %arg7[%c0_29, %c0_30] : memref<16x1xf32, #tpu.memory_space<vmem>>, vector<16x1xf32>
      %58 = vector.shape_cast %57 : vector<16x1xf32> to vector<1x16x1xf32>
      %cst_31 = arith.constant dense<0.000000e+00> : vector<1xf32>
      %59 = vector.multi_reduction <add>, %58, %cst_31 [1, 2] : vector<1x16x1xf32> to vector<1xf32>
      %60 = vector.shape_cast %59 : vector<1xf32> to vector<1x1x1xf32>
      %61 = vector.extract %60[0, 0, 0] : f32 from vector<1x1x1xf32>
      %cst_32 = arith.constant 6.250000e-02 : f32
      %62 = arith.mulf %61, %cst_32 : f32
      %63 = arith.subf %56, %62 : f32
      %64 = vector.broadcast %63 : f32 to vector<1x8x128xf32>
      %c0_33 = arith.constant 0 : index
      %c0_34 = arith.constant 0 : index
      %c0_35 = arith.constant 0 : index
      %65 = vector.load %arg4[%c0_33, %c0_34, %c0_35] : memref<1x8x128xf32, #tpu.memory_space<vmem>>, vector<1x8x128xf32>
      tpu.vector_store %arg4[%c0_33, %c0_34, %c0_35], %64 {strides = array<i32>} : memref<1x8x128xf32, #tpu.memory_space<vmem>>, vector<1x8x128xf32>,
    } else {
    }
    return
  }
  func.func @transform_0(%arg0: i32, %arg1: i32) -> (i32, i32) {
    %c0_i32 = arith.constant 0 : i32
    return %arg0, %arg1 : i32, i32
  }
  func.func @transform_1(%arg0: i32, %arg1: i32) -> (i32, i32) {
    %c0_i32 = arith.constant 0 : i32
    %c0_i32_0 = arith.constant 0 : i32
    return %c0_i32, %arg1 : i32, i32
  }
  func.func @transform_2(%arg0: i32, %arg1: i32) -> (i32, i32, i32) {
    %c0_i32 = arith.constant 0 : i32
    %c0_i32_0 = arith.constant 0 : i32
    %c0_i32_1 = arith.constant 0 : i32
    return %arg0, %c0_i32, %c0_i32_0 : i32, i32, i32
  }
}

</mosaic_0001>

<llo_original>
// kernel: dino_forward.3
$region0: #{dino_forward.3}
  #allocation0 [shape = 'u32[]', space=smem, size = 0x4, offset = 0x4, fixed_abs, tag = 'smem constant byte address 0x4 - core index']
  #allocation1 [shape = 'u32[144,128]{1,0:T(1,128)}', space=vmem, size = 0x12000, scoped, tag = 'internal scratch']
  #allocation2 [shape = 'f32[16,1]{1,0:T(8,128)}', space=vmem, size = 0x2000, scoped, tag = 'scratch operand']
  #allocation3 [shape = 'f32[16,1]{1,0:T(8,128)}', space=vmem, size = 0x2000, scoped, tag = 'scratch operand']
  #allocation4 [shape = 'f32[16,1]{1,0:T(8,128)}', space=vmem, size = 0x2000, scoped, tag = 'scratch operand']
  %s0 = inlined_call_operand.hbm [shape: f32[64,256], index: 0, kind: input, shape index: {}]
  %s1 = inlined_call_operand.vmem [shape: bf16[32,256], index: 1, kind: input, shape index: {}]
  %s2 = inlined_call_operand.vmem [shape: f32[4,8,128], index: 2, kind: output, shape index: {}]
  %s3 = sld [smem:[#allocation0]]
  $region94: #{dino_forward.3} parent=0
    _
  %s5 = ssub.s32 1, %s3
  %s6 = scalar_select 0, %s5, %s3
  $region1: #{dino_forward.3} parent=0
    #allocation5 [shape = 'u8[16384]{0}', space=vmem, size = 0x4000, scoped, tag = 'input window, operand 0']
    #allocation6 [shape = 's32[2]{0}', space=sflag, size = 0x8, scoped, tag = 'scoped memory for dino_forward.3']
    #allocation7 [shape = 'u8[16384]{0}', space=vmem, size = 0x4000, scoped, tag = 'input window, operand 1']
    %7 = vsyncpa [#allocation6], 0
    %s8 = scalar_lea.sflag [#allocation6], 1
    %9 = vsyncpa %s8, 0
    loop: start=0, step=1, limit=10
    $region2: #{dino_forward.3} parent=1 // loop_pre_header
      _
    $region3: #{dino_forward.3} parent=1 // loop_header
      %s11 = sphi 0, %s15
      %p12 = scmp.ge.s32.totalorder %s11, 10
      %s18 = sphi 0, %s30
      %s19 = sphi 0, %s26
      %s20 = sphi 0, %s18
      %s21 = sphi 0, %s19
      %s22 = sphi 0, %s20
      %s23 = sphi 0, %s21
      %s35 = sphi 0, %s37
      %s38 = sphi 0, %s35
      %s39 = sphi 0, %s38
      %s55 = sphi 0, %s39
      %s61 = sphi 0, %s63
      %s64 = sphi 0, %s61
      %s65 = sphi 0, %s64
      %s81 = sphi 0, %s65
      %s87 = sphi 0, %s89
      %s90 = sphi 0, %s87
      %s91 = sphi 0, %s90
      %s107 = sphi 0, %s91
    $region4: #{dino_forward.3} parent=1 // loop_header_branch
      %14 = sbr.rel (%p12) target = $region8
    $region5: #{dino_forward.3} parent=1 // loop_body
      %s16 = ssub.s32 %s11, 1
      %s17 = ssub.s32 %s11, 2
      %s24 = sadd.s32 1, %s19
      %p25 = scmp.ge.s32.totalorder %s24, 2
      %s26 = scalar_select %p25, 0, %s24
      %s27 = sadd.s32 1, %s18
      %s28 = scalar_select %p25, %s27, %s18
      %p29 = scmp.ge.s32.totalorder %s28, 4
      %s30 = scalar_select %p29, 0, %s28
      %s31 = ssub.s32 %s18, %s30
      %s32 = ssub.s32 %s19, %s26
      %s33 = sor.u32 %s31, %s32
      %p34 = scmp.eq.s32.totalorder %s33, 0
      %s36 = sadd.s32 %s35, 1
      %s37 = scalar_select %p34, %s35, %s36
      %p40 = pneg %p34
      %p41 = scmp.eq.s32.totalorder %s11, 7
      %p42 = por %p40, %p41
      %p43 = scmp.ne.s32.totalorder %s35, %s38
      %p44 = scmp.eq.s32.totalorder %s11, 0
      %p45 = por %p43, %p44
      %p46 = scmp.ne.s32.totalorder %s35, %s38
      %p47 = scmp.eq.s32.totalorder %s16, 7
      %p48 = por %p46, %p47
      %p49 = scmp.ne.s32.totalorder %s38, %s39
      %p50 = scmp.eq.s32.totalorder %s16, 0
      %p51 = por %p49, %p50
      %p52 = scmp.ne.s32.totalorder %s38, %s39
      %p53 = scmp.eq.s32.totalorder %s17, 7
      %p54 = por %p52, %p53
      %p56 = scmp.ne.s32.totalorder %s39, %s55
      %p57 = scmp.eq.s32.totalorder %s17, 0
      %p58 = por %p56, %p57
      %s59 = ssub.s32 %s19, %s26
      %p60 = scmp.eq.s32.totalorder %s59, 0
      %s62 = sadd.s32 %s61, 1
      %s63 = scalar_select %p60, %s61, %s62
      %p66 = pneg %p60
      %p67 = scmp.eq.s32.totalorder %s11, 7
      %p68 = por %p66, %p67
      %p69 = scmp.ne.s32.totalorder %s61, %s64
      %p70 = scmp.eq.s32.totalorder %s11, 0
      %p71 = por %p69, %p70
      %p72 = scmp.ne.s32.totalorder %s61, %s64
      %p73 = scmp.eq.s32.totalorder %s16, 7
      %p74 = por %p72, %p73
      %p75 = scmp.ne.s32.totalorder %s64, %s65
      %p76 = scmp.eq.s32.totalorder %s16, 0
      %p77 = por %p75, %p76
      %p78 = scmp.ne.s32.totalorder %s64, %s65
      %p79 = scmp.eq.s32.totalorder %s17, 7
      %p80 = por %p78, %p79
      %p82 = scmp.ne.s32.totalorder %s65, %s81
      %p83 = scmp.eq.s32.totalorder %s17, 0
      %p84 = por %p82, %p83
      %s85 = ssub.s32 %s18, %s30
      %p86 = scmp.eq.s32.totalorder %s85, 0
      %s88 = sadd.s32 %s87, 1
      %s89 = scalar_select %p86, %s87, %s88
      %p92 = pneg %p86
      %p93 = scmp.eq.s32.totalorder %s11, 7
      %p94 = por %p92, %p93
      %p95 = scmp.ne.s32.totalorder %s87, %s90
      %p96 = scmp.eq.s32.totalorder %s11, 0
      %p97 = por %p95, %p96
      %p98 = scmp.ne.s32.totalorder %s87, %s90
      %p99 = scmp.eq.s32.totalorder %s16, 7
      %p100 = por %p98, %p99
      %p101 = scmp.ne.s32.totalorder %s90, %s91
      %p102 = scmp.eq.s32.totalorder %s16, 0
      %p103 = por %p101, %p102
      %p104 = scmp.ne.s32.totalorder %s90, %s91
      %p105 = scmp.eq.s32.totalorder %s17, 7
      %p106 = por %p104, %p105
      %p108 = scmp.ne.s32.totalorder %s91, %s107
      %p109 = scmp.eq.s32.totalorder %s17, 0
      %p110 = por %p108, %p109
      %p111 = scmp.le.s32.totalorder 1, %s11
      %p112 = scmp.lt.s32.totalorder %s11, 9
      %p113 = pnand %p111, %p112
      %p114 = pneg %p113
      // Predicated region
      $region9: #{dino_forward.3} parent=5 // pred_check
        _
      $region10: #{dino_forward.3} parent=5 // pred_check_branch
        %116 = sbr.rel (%p113) target = $region12
      $region11: #{dino_forward.3} parent=5 // pred_region
        %s117 = ssub.s32 %s11, 1
      $region12: #{dino_forward.3} parent=5 // pred_fallthru
        _
      %p118 = scmp.lt.s32.totalorder %s11, 8
      // Predicated region
      $region13: #{dino_forward.3} parent=5 // pred_check
        %p119 = pneg %p118
      $region14: #{dino_forward.3} parent=5 // pred_check_branch
        %121 = sbr.rel (%p119) target = $region16
      $region15: #{dino_forward.3} parent=5 // pred_region
        // Predicated region
        $region17: #{dino_forward.3} parent=15 // pred_check
          %p122 = pneg %p45
        $region18: #{dino_forward.3} parent=15 // pred_check_branch
          %124 = sbr.rel (%p122) target = $region20
        $region19: #{dino_forward.3} parent=15 // pred_region
          %s125 = sand.u32 %s35, 1
          %s126 = scalar_lea.sflag [#allocation6], %s125
          %s127 = sand.u32 %s35, 1
          %s128 = smul.addr %s127, 16
          %s129 = scalar_lea.vmem [#allocation5], %s128
          %s130 = smul.u32 2, %s18
          %s132 = ssub.s32 256, 256
          %133 = vsyncadd %s126, %s132
          %s134 = smul.addr %s130, 2
          %s135 = sadd.s32 %s19, %s134
          %s136 = smul.addr %s135, 128
          %s137 = scalar_lea.hbm %s0, %s136
          %s138 = sshll.u32 %s129, 4
          %s139 = int_to_ptr.vmem [resolvable:$true] %s138
          %144 = dma.hbm_to_vmem [thread:$0]  %s137, 256, %s139, %s126, 256, 128, 8
        $region20: #{dino_forward.3} parent=15 // pred_fallthru
          _
        // Predicated region
        $region21: #{dino_forward.3} parent=15 // pred_check
          %p145 = pneg %p71
        $region22: #{dino_forward.3} parent=15 // pred_check_branch
          %147 = sbr.rel (%p145) target = $region24
        $region23: #{dino_forward.3} parent=15 // pred_region
          %s148 = sand.u32 %s61, 1
          %s149 = sand.u32 %s61, 1
          %s150 = smul.addr %s149, 16
          %s151 = scalar_lea.vmem [#allocation7], %s150
          %s152 = smul.addr %s19, 4
          %s153 = scalar_lea.vmem %s1, %s152
          // Predicated region
          $region25: #{dino_forward.3} parent=23 // pred_check
            _
          $region26: #{dino_forward.3} parent=23 // pred_check_branch
            %155 = sbr.rel (0) target = $region28
          $region27: #{dino_forward.3} parent=23 // pred_region
            // Predicated region
            $region29: #{dino_forward.3} parent=27 // pred_check
              _
            $region30: #{dino_forward.3} parent=27 // pred_check_branch
              %157 = sbr.rel target = $region32
            $region31: #{dino_forward.3} parent=27 // pred_region
              // Predicated region
              $region44: #{dino_forward.3} parent=31 // pred_check
                _
              $region45: #{dino_forward.3} parent=31 // pred_check_branch
                %178 = sbr.rel (0) target = $region47
              $region46: #{dino_forward.3} parent=31 // pred_region
                loop: start=0, step=1, limit=1
                $region48: #{dino_forward.3} parent=46 // loop_pre_header
                  _
                $region49: #{dino_forward.3} parent=46 // loop_header
                  %s180 = sphi 0, %s184
                  %p181 = scmp.ge.s32.totalorder %s180, 1
                  %s185 = sphi %s153, %s153
                  %s186 = sphi %s151, %s151
                $region50: #{dino_forward.3} parent=46 // loop_header_branch
                  %183 = sbr.rel (%p181) target = $region54
                $region51: #{dino_forward.3} parent=46 // loop_body
                  _
                $region52: #{dino_forward.3} parent=46 // loop_footer
                  %s184 = sadd.s32 1, %s180
                $region53: #{dino_forward.3} parent=46 // loop_footer_branch
                  %179 = sbr.rel target = $region49
                $region54: #{dino_forward.3} parent=46 // loop_exit
                  _
                loop: start=0, step=1, limit=1
                $region55: #{dino_forward.3} parent=46 // loop_pre_header
                  _
                $region56: #{dino_forward.3} parent=46 // loop_header
                  %s189 = sphi 0, %s193
                  %p190 = scmp.ge.s32.totalorder %s189, 1
                  %s194 = sphi %s153, %s153
                  %s195 = sphi %s151, %s151
                $region57: #{dino_forward.3} parent=46 // loop_header_branch
                  %192 = sbr.rel (%p190) target = $region61
                $region58: #{dino_forward.3} parent=46 // loop_body
                  %v196 = vld [vmem:[%s194] sm:$0xf]
                  %197 = vst [vmem:[%s195] sm:$0xf] %v196
                  %v198 = vld [vmem:[%s194 + $0x8] sm:$0xf]
                  %199 = vst [vmem:[%s195 + $0x4] sm:$0xf] %v198
                  %v200 = vld [vmem:[%s194 + $0x10] sm:$0xf]
                  %201 = vst [vmem:[%s195 + $0x8] sm:$0xf] %v200
                  %v202 = vld [vmem:[%s194 + $0x18] sm:$0xf]
                  %203 = vst [vmem:[%s195 + $0xc] sm:$0xf] %v202
                $region59: #{dino_forward.3} parent=46 // loop_footer
                  %s193 = sadd.s32 1, %s189
                $region60: #{dino_forward.3} parent=46 // loop_footer_branch
                  %188 = sbr.rel target = $region56
                $region61: #{dino_forward.3} parent=46 // loop_exit
                  _
              $region47: #{dino_forward.3} parent=31 // pred_fallthru
                _
            $region32: #{dino_forward.3} parent=27 // pred_fallthru
              _
            // Predicated region
            $region33: #{dino_forward.3} parent=27 // pred_check
              _
            $region34: #{dino_forward.3} parent=27 // pred_check_branch
              %159 = sbr.rel (0) target = $region36
            $region35: #{dino_forward.3} parent=27 // pred_region
              loop: start=0, step=1, limit=1
              $region37: #{dino_forward.3} parent=35 // loop_pre_header
                _
              $region38: #{dino_forward.3} parent=35 // loop_header
                %s162 = sphi 0, %s166
                %p163 = scmp.ge.s32.totalorder %s162, 1
                %s167 = sphi %s153, %s153
                %s168 = sphi %s151, %s151
              $region39: #{dino_forward.3} parent=35 // loop_header_branch
                %165 = sbr.rel (%p163) target = $region43
              $region40: #{dino_forward.3} parent=35 // loop_body
                %v169 = vld [vmem:[%s167] sm:$0xf]
                %170 = vst [vmem:[%s168] sm:$0xf] %v169
                %v171 = vld [vmem:[%s167 + $0x8] sm:$0xf]
                %172 = vst [vmem:[%s168 + $0x4] sm:$0xf] %v171
                %v173 = vld [vmem:[%s167 + $0x10] sm:$0xf]
                %174 = vst [vmem:[%s168 + $0x8] sm:$0xf] %v173
                %v175 = vld [vmem:[%s167 + $0x18] sm:$0xf]
                %176 = vst [vmem:[%s168 + $0xc] sm:$0xf] %v175
              $region41: #{dino_forward.3} parent=35 // loop_footer
                %s166 = sadd.s32 1, %s162
              $region42: #{dino_forward.3} parent=35 // loop_footer_branch
                %161 = sbr.rel target = $region38
              $region43: #{dino_forward.3} parent=35 // loop_exit
                _
            $region36: #{dino_forward.3} parent=27 // pred_fallthru
              _
          $region28: #{dino_forward.3} parent=23 // pred_fallthru
            _
          %204 = vnop
        $region24: #{dino_forward.3} parent=15 // pred_fallthru
          _
      $region16: #{dino_forward.3} parent=5 // pred_fallthru
        _
      %p205 = scmp.le.s32.totalorder 1, %s11
      %p206 = scmp.lt.s32.totalorder %s11, 9
      %p207 = pnand %p205, %p206
      %p208 = pneg %p207
      // Predicated region
      $region62: #{dino_forward.3} parent=5 // pred_check
        _
      $region63: #{dino_forward.3} parent=5 // pred_check_branch
        %210 = sbr.rel (%p207) target = $region65
      $region64: #{dino_forward.3} parent=5 // pred_region
        %s211 = ssub.s32 %s11, 1
        %s212 = sand.u32 %s38, 1
        %s213 = scalar_lea.sflag [#allocation6], %s212
        %s214 = sand.u32 %s38, 1
        %s215 = smul.addr %s214, 16
        %s216 = scalar_lea.vmem [#allocation5], %s215
        // Predicated region
        $region66: #{dino_forward.3} parent=64 // pred_check
          %p217 = pneg %p51
        $region67: #{dino_forward.3} parent=64 // pred_check_branch
          %219 = sbr.rel (%p217) target = $region69
        $region68: #{dino_forward.3} parent=64 // pred_region
          %220 = dma.done %s213, 256
        $region69: #{dino_forward.3} parent=64 // pred_fallthru
          _
        %s221 = sand.u32 %s64, 1
        %s222 = sand.u32 %s64, 1
        %s223 = smul.addr %s222, 16
        %s224 = scalar_lea.vmem [#allocation7], %s223
        // Predicated region
        $region70: #{dino_forward.3} parent=64 // pred_check
          %p225 = pneg %p77
        $region71: #{dino_forward.3} parent=64 // pred_check_branch
          %227 = sbr.rel (%p225) target = $region73
        $region72: #{dino_forward.3} parent=64 // pred_region
          _
        $region73: #{dino_forward.3} parent=64 // pred_fallthru
          _
        %s228 = sand.u32 %s38, 1
        %s229 = scalar_lea.sflag [#allocation6], %s228
        %s230 = sand.u32 %s38, 1
        %s231 = smul.addr %s230, 16
        %s232 = scalar_lea.vmem [#allocation5], %s231
        %p233 = pneg %p51
        %p234 = pneg %p48
        %s235 = sand.u32 %s64, 1
        %s236 = sand.u32 %s64, 1
        %s237 = smul.addr %s236, 16
        %s238 = scalar_lea.vmem [#allocation7], %s237
        %p239 = pneg %p77
        %p240 = pneg %p74
        %p241 = pneg %p103
        %p242 = pneg %p100
        %p243 = scmp.lt.s32.totalorder %s20, 3
        %s244 = scalar_select %p243, %s20, 3
        %s245 = smul.addr %s244, 8
        %s246 = scalar_lea.vmem %s2, %s245
        %s247 = smul.u32 2, %s20
        %p248 = scmp.lt.s32.totalorder %s20, 3
        %s249 = scalar_select %p248, %s20, 3
        %s250 = smul.addr %s249, 8
        %s251 = scalar_lea.vmem %s2, %s250
        %p252 = scmp.eq.s32.totalorder %s21, 0
        // Predicated region
        $region74: #{dino_forward.3} parent=64 // pred_check
          %p253 = pneg %p252
        $region75: #{dino_forward.3} parent=64 // pred_check_branch
          %255 = sbr.rel (%p253) target = $region77
        $region76: #{dino_forward.3} parent=64 // pred_region
          %vm256 = vcmask 7168
          %257 = vst.msk [vmem:[#allocation2] sm:$0xff] %vm256, -inf
          %258 = vst.msk [vmem:[#allocation2 + $0x8] sm:$0xff] %vm256, -inf
          %259 = vst.msk [vmem:[#allocation3] sm:$0xff] %vm256, 0.0
          %260 = vst.msk [vmem:[#allocation3 + $0x8] sm:$0xff] %vm256, 0.0
          %261 = vst.msk [vmem:[#allocation4] sm:$0xff] %vm256, 0.0
          %262 = vst.msk [vmem:[#allocation4 + $0x8] sm:$0xff] %vm256, 0.0
        $region77: #{dino_forward.3} parent=64 // pred_fallthru
          _
        %v263 = vld [vmem:[%s216] sm:$0xff]
        %v264 = vld [vmem:[%s216 + $0x8] sm:$0xff]
        %v265 = vmul.f32 %v263, 10.0
        %v266 = vmul.f32 %v264, 10.0
        %v267 = vld [vmem:[#allocation2] sm:$0xff]
        %v268 = vld [vmem:[#allocation2 + $0x8] sm:$0xff]
        %269 = vmax.xlane.f32.xlu0 %v265
        %v270 = vpop.xlane.xlu0 %269
        %271 = vmax.xlane.f32.xlu0 %v266
        %v272 = vpop.xlane.xlu0 %271
        %v273 = vmax.f32 %v267, %v270
        %v274 = vmax.f32 %v268, %v272
        %v275 = vld [vmem:[#allocation3] sm:$0xff]
        %v276 = vld [vmem:[#allocation3 + $0x8] sm:$0xff]
        %v277 = vsub.f32 %v267, %v273
        %v278 = vsub.f32 %v268, %v274
        %v279 = vmul.f32 %v277, 1.442695
        %v280 = vpow.pop %v279
        %v281 = vmul.f32 %v278, 1.442695
        %v282 = vpow.pop %v281
        %v283 = vmul.f32 %v275, %v280
        %v284 = vmul.f32 %v276, %v282
        %286 = vset.pattern.permute.xlu0 0
        %287 = vperm.xlu0 %286, %v273
        %v288 = vpop.permute.xlu0 %287
        %291 = vset.pattern.permute.xlu0 0
        %292 = vperm.xlu0 %291, %v274
        %v293 = vpop.permute.xlu0 %292
        %v295 = vsub.f32 %v265, %v288
        %v296 = vsub.f32 %v266, %v293
        %v297 = vmul.f32 %v295, 1.442695
        %v298 = vpow.pop %v297
        %v299 = vmul.f32 %v296, 1.442695
        %v300 = vpow.pop %v299
        %301 = vadd.xlane.f32.xlu0 %v298
        %v302 = vpop.xlane.xlu0 %301
        %303 = vadd.xlane.f32.xlu0 %v300
        %v304 = vpop.xlane.xlu0 %303
        %v305 = vadd.f32 %v283, %v302
        %v306 = vadd.f32 %v284, %v304
        %vm307 = vcmask 7168
        %308 = vst.msk [vmem:[#allocation3] sm:$0xff] %vm307, %v305
        %309 = vst.msk [vmem:[#allocation3 + $0x8] sm:$0xff] %vm307, %v306
        %310 = vst.msk [vmem:[#allocation2] sm:$0xff] %vm307, %v273
        %311 = vst.msk [vmem:[#allocation2 + $0x8] sm:$0xff] %vm307, %v274
        %p312 = scmp.ne.s32.totalorder %s20, 0
        %s313 = scalar_select %p312, 1, 0
        %s314 = scvt.s32.f32 %s313
        %p315 = scmp.ne.s32.totalorder %s20, 1
        %s316 = scalar_select %p315, 1, 0
        %s317 = scvt.s32.f32 %s316
        %v318 = vld [vmem:[%s224] sm:$0xf]
        %v319 = vld [vmem:[%s224 + $0x4] sm:$0xf]
        %v320 = vunpack.c.l.bf16 %v318
        %v321 = vunpack.c.l.bf16 %v319
        %v322 = vld [vmem:[%s224 + $0x8] sm:$0xf]
        %v323 = vld [vmem:[%s224 + $0xc] sm:$0xf]
        %v324 = vunpack.c.l.bf16 %v322
        %v325 = vunpack.c.l.bf16 %v323
        %v326 = vld [vmem:[#allocation4] sm:$0xff]
        %v327 = vld [vmem:[#allocation4 + $0x8] sm:$0xff]
        %v328 = vstv %s314
        %v329 = vmul.f32 %v328, %v320
        %v330 = vmul.f32 %v328, %v321
        %v331 = vstv %s317
        %v332 = vmul.f32 %v331, %v324
        %v333 = vmul.f32 %v331, %v325
        %v334 = vadd.f32 %v329, %v332
        %v335 = vadd.f32 %v330, %v333
        %v336 = vmul.f32 %v334, %v265
        %v337 = vmul.f32 %v335, %v266
        %338 = vadd.xlane.f32.xlu0 %v336
        %v339 = vpop.xlane.xlu0 %338
        %340 = vadd.xlane.f32.xlu0 %v337
        %v341 = vpop.xlane.xlu0 %340
        %v342 = vadd.f32 %v326, %v339
        %v343 = vadd.f32 %v327, %v341
        %344 = vst.msk [vmem:[#allocation4] sm:$0xff] %vm307, %v342
        %345 = vst.msk [vmem:[#allocation4 + $0x8] sm:$0xff] %vm307, %v343
        %p346 = scmp.eq.s32.totalorder %s21, 1
        // Predicated region
        $region78: #{dino_forward.3} parent=64 // pred_check
          %p347 = pneg %p346
        $region79: #{dino_forward.3} parent=64 // pred_check_branch
          %349 = sbr.rel (%p347) target = $region81
        $region80: #{dino_forward.3} parent=64 // pred_region
          %v350 = vld [vmem:[#allocation2] sm:$0xff]
          %v351 = vld [vmem:[#allocation2 + $0x8] sm:$0xff]
          %v352 = vld [vmem:[#allocation3] sm:$0xff]
          %v353 = vld [vmem:[#allocation3 + $0x8] sm:$0xff]
          %v354 = vlog2.pop %v352
          %v355 = vmul.f32 %v354, 0.6931472
          %v356 = vlog2.pop %v353
          %v357 = vmul.f32 %v356, 0.6931472
          %v358 = vadd.f32 %v350, %v355
          %v359 = vadd.f32 %v351, %v357
          %s360 = sadd.f32 %s314, %s317
          %v361 = vsel %vm307, %v358, 0.0
          %v362 = vsel %vm307, %v359, 0.0
          %v363 = vadd.f32 %v361, %v362
          %364 = vadd.xlane.f32.xlu0 %v363
          %v365 = vpop.xlane.xlu0 %364
          %v366 = vrot.slane %v365, 4
          %v367 = vadd.f32 %v365, %v366
          %v368 = vrot.slane %v367, 2
          %v369 = vadd.f32 %v367, %v368
          %v370 = vrot.slane %v369, 1
          %v371 = vadd.f32 %v369, %v370
          %s372 = vtos %v371
          %s373 = smul.f32 %s360, %s372
          %s374 = smul.f32 %s373, 0.0625
          %v375 = vld [vmem:[#allocation4] sm:$0xff]
          %v376 = vld [vmem:[#allocation4 + $0x8] sm:$0xff]
          %v377 = vsel %vm307, %v375, 0.0
          %v378 = vsel %vm307, %v376, 0.0
          %v379 = vadd.f32 %v377, %v378
          %380 = vadd.xlane.f32.xlu0 %v379
          %v381 = vpop.xlane.xlu0 %380
          %v382 = vrot.slane %v381, 4
          %v383 = vadd.f32 %v381, %v382
          %v384 = vrot.slane %v383, 2
          %v385 = vadd.f32 %v383, %v384
          %v386 = vrot.slane %v385, 1
          %v387 = vadd.f32 %v385, %v386
          %s388 = vtos %v387
          %s389 = smul.f32 %s388, 0.0625
          %s390 = ssub.f32 %s374, %s389
          %v391 = vstv %s390
          %392 = vst [vmem:[%s251] sm:$0xff] %v391
        $region81: #{dino_forward.3} parent=64 // pred_fallthru
          _
        %p393 = scmp.lt.s32.totalorder %s20, 3
        %s394 = scalar_select %p393, %s20, 3
        %s395 = smul.addr %s394, 8
        %s396 = scalar_lea.vmem %s2, %s395
        // Predicated region
        $region82: #{dino_forward.3} parent=64 // pred_check
          %p397 = pneg %p100
        $region83: #{dino_forward.3} parent=64 // pred_check_branch
          %399 = sbr.rel (%p397) target = $region85
        $region84: #{dino_forward.3} parent=64 // pred_region
          _
        $region85: #{dino_forward.3} parent=64 // pred_fallthru
          _
      $region65: #{dino_forward.3} parent=5 // pred_fallthru
        _
      %p400 = scmp.le.s32.totalorder 2, %s11
      // Predicated region
      $region86: #{dino_forward.3} parent=5 // pred_check
        %p401 = pneg %p400
      $region87: #{dino_forward.3} parent=5 // pred_check_branch
        %403 = sbr.rel (%p401) target = $region89
      $region88: #{dino_forward.3} parent=5 // pred_region
        %s404 = ssub.s32 %s11, 2
        // Predicated region
        $region90: #{dino_forward.3} parent=88 // pred_check
          %p405 = pneg %p106
        $region91: #{dino_forward.3} parent=88 // pred_check_branch
          %407 = sbr.rel (%p405) target = $region93
        $region92: #{dino_forward.3} parent=88 // pred_region
          %p408 = scmp.lt.s32.totalorder %s22, 3
          %s409 = scalar_select %p408, %s22, 3
          %s410 = smul.addr %s409, 8
          %s411 = scalar_lea.vmem %s2, %s410
        $region93: #{dino_forward.3} parent=88 // pred_fallthru
          _
      $region89: #{dino_forward.3} parent=5 // pred_fallthru
        _
    $region6: #{dino_forward.3} parent=1 // loop_footer
      %s15 = sadd.s32 1, %s11
    $region7: #{dino_forward.3} parent=1 // loop_footer_branch
      %10 = sbr.rel target = $region3
    $region8: #{dino_forward.3} parent=1 // loop_exit
      _
    %412 = vsyncpa [#allocation6], 1
    %s413 = scalar_lea.sflag [#allocation6], 1
    %414 = vsyncpa %s413, 1

// kernel: dino_forward.2
$region0: #{dino_forward.2}
  #allocation0 [shape = 'u32[]', space=smem, size = 0x4, offset = 0x4, fixed_abs, tag = 'smem constant byte address 0x4 - core index']
  #allocation1 [shape = 'u32[144,128]{1,0:T(1,128)}', space=vmem, size = 0x12000, scoped, tag = 'internal scratch']
  #allocation2 [shape = 's32[1]{0}', space=sflag, size = 0x4, scoped, tag = 'scoped memory for dino_forward.2']
  #allocation3 [shape = 'f32[1]{0:T(128)S(6)}', space=smem, size = 0x200, scoped, tag = 'prefetched SMEM operand 0']
  %s0 = inlined_call_operand.<no memory space> [shape: f32[1], index: 0, kind: input, shape index: {}]
  %s1 = inlined_call_operand.hbm [shape: f32[32,256], index: 1, kind: input, shape index: {}]
  %s2 = inlined_call_operand.vmem [shape: f32[1,256], index: 2, kind: input, shape index: {}]
  %s3 = inlined_call_operand.vmem [shape: bf16[32,256], index: 3, kind: output, shape index: {0}]
  %s4 = inlined_call_operand.hbm [shape: f32[1,256], index: 4, kind: output, shape index: {1}]
  %5 = xla_tuple %s3, %s4
  %s6 = sld [smem:[#allocation0]]
  $region57: #{dino_forward.2} parent=0
    _
  %s8 = ssub.s32 1, %s6
  %s9 = scalar_select 0, %s8, %s6
  %10 = sst [smem:[#allocation3]] %s0
  $region1: #{dino_forward.2} parent=0
    #allocation4 [shape = 'u8[32768]{0}', space=vmem, size = 0x8000, scoped, tag = 'input window, operand 1']
    #allocation5 [shape = 's32[2]{0}', space=sflag, size = 0x8, scoped, tag = 'scoped memory for dino_forward.2']
    #allocation6 [shape = 's32[2]{0}', space=sflag, size = 0x8, scoped, tag = 'scoped memory for dino_forward.2']
    #allocation7 [shape = 'u8[1024]{0}', space=vmem, size = 0x400, scoped, tag = 'output window, operand 1, single buffered']
    %11 = vsyncpa [#allocation5], 0
    %s12 = scalar_lea.sflag [#allocation5], 1
    %13 = vsyncpa %s12, 0
    %14 = vsyncpa [#allocation6], 0
    loop: start=0, step=1, limit=4
    $region2: #{dino_forward.2} parent=1 // loop_pre_header
      _
    $region3: #{dino_forward.2} parent=1 // loop_header
      %s16 = sphi 0, %s20
      %p17 = scmp.ge.s32.totalorder %s16, 4
      %s26 = sphi 0, %s28
      %s29 = sphi 0, %s26
      %s30 = sphi 0, %s29
      %s46 = sphi 0, %s30
      %s50 = sphi 0, %s50
      %s52 = sphi 0, %s50
      %s53 = sphi 0, %s52
      %s67 = sphi 0, %s53
      %s73 = sphi 0, %s75
      %s76 = sphi 0, %s73
      %s77 = sphi 0, %s76
      %s93 = sphi 0, %s77
      %s97 = sphi 0, %s97
      %s99 = sphi 0, %s97
      %s100 = sphi 0, %s99
      %s114 = sphi 0, %s100
    $region4: #{dino_forward.2} parent=1 // loop_header_branch
      %19 = sbr.rel (%p17) target = $region8
    $region5: #{dino_forward.2} parent=1 // loop_body
      %s21 = ssub.s32 %s16, 1
      %s22 = ssub.s32 %s16, 2
      %s23 = sadd.s32 %s16, 1
      %s24 = ssub.s32 %s16, %s23
      %p25 = scmp.eq.s32.totalorder %s24, 0
      %s27 = sadd.s32 %s26, 1
      %s28 = scalar_select %p25, %s26, %s27
      %p31 = pneg %p25
      %p32 = scmp.eq.s32.totalorder %s16, 1
      %p33 = por %p31, %p32
      %p34 = scmp.ne.s32.totalorder %s26, %s29
      %p35 = scmp.eq.s32.totalorder %s16, 0
      %p36 = por %p34, %p35
      %p37 = scmp.ne.s32.totalorder %s26, %s29
      %p38 = scmp.eq.s32.totalorder %s21, 1
      %p39 = por %p37, %p38
      %p40 = scmp.ne.s32.totalorder %s29, %s30
      %p41 = scmp.eq.s32.totalorder %s21, 0
      %p42 = por %p40, %p41
      %p43 = scmp.ne.s32.totalorder %s29, %s30
      %p44 = scmp.eq.s32.totalorder %s22, 1
      %p45 = por %p43, %p44
      %p47 = scmp.ne.s32.totalorder %s30, %s46
      %p48 = scmp.eq.s32.totalorder %s22, 0
      %p49 = por %p47, %p48
      %s51 = sadd.s32 %s50, 1
      %p54 = scmp.eq.s32.totalorder %s16, 1
      %p55 = scmp.ne.s32.totalorder %s50, %s52
      %p56 = scmp.eq.s32.totalorder %s16, 0
      %p57 = por %p55, %p56
      %p58 = scmp.ne.s32.totalorder %s50, %s52
      %p59 = scmp.eq.s32.totalorder %s21, 1
      %p60 = por %p58, %p59
      %p61 = scmp.ne.s32.totalorder %s52, %s53
      %p62 = scmp.eq.s32.totalorder %s21, 0
      %p63 = por %p61, %p62
      %p64 = scmp.ne.s32.totalorder %s52, %s53
      %p65 = scmp.eq.s32.totalorder %s22, 1
      %p66 = por %p64, %p65
      %p68 = scmp.ne.s32.totalorder %s53, %s67
      %p69 = scmp.eq.s32.totalorder %s22, 0
      %p70 = por %p68, %p69
      %s71 = ssub.s32 %s16, %s23
      %p72 = scmp.eq.s32.totalorder %s71, 0
      %s74 = sadd.s32 %s73, 1
      %s75 = scalar_select %p72, %s73, %s74
      %p78 = pneg %p72
      %p79 = scmp.eq.s32.totalorder %s16, 1
      %p80 = por %p78, %p79
      %p81 = scmp.ne.s32.totalorder %s73, %s76
      %p82 = scmp.eq.s32.totalorder %s16, 0
      %p83 = por %p81, %p82
      %p84 = scmp.ne.s32.totalorder %s73, %s76
      %p85 = scmp.eq.s32.totalorder %s21, 1
      %p86 = por %p84, %p85
      %p87 = scmp.ne.s32.totalorder %s76, %s77
      %p88 = scmp.eq.s32.totalorder %s21, 0
      %p89 = por %p87, %p88
      %p90 = scmp.ne.s32.totalorder %s76, %s77
      %p91 = scmp.eq.s32.totalorder %s22, 1
      %p92 = por %p90, %p91
      %p94 = scmp.ne.s32.totalorder %s77, %s93
      %p95 = scmp.eq.s32.totalorder %s22, 0
      %p96 = por %p94, %p95
      %s98 = sadd.s32 %s97, 1
      %p101 = scmp.eq.s32.totalorder %s16, 1
      %p102 = scmp.ne.s32.totalorder %s97, %s99
      %p103 = scmp.eq.s32.totalorder %s16, 0
      %p104 = por %p102, %p103
      %p105 = scmp.ne.s32.totalorder %s97, %s99
      %p106 = scmp.eq.s32.totalorder %s21, 1
      %p107 = por %p105, %p106
      %p108 = scmp.ne.s32.totalorder %s99, %s100
      %p109 = scmp.eq.s32.totalorder %s21, 0
      %p110 = por %p108, %p109
      %p111 = scmp.ne.s32.totalorder %s99, %s100
      %p112 = scmp.eq.s32.totalorder %s22, 1
      %p113 = por %p111, %p112
      %p115 = scmp.ne.s32.totalorder %s100, %s114
      %p116 = scmp.eq.s32.totalorder %s22, 0
      %p117 = por %p115, %p116
      %p118 = scmp.le.s32.totalorder 1, %s16
      %p119 = scmp.lt.s32.totalorder %s16, 3
      %p120 = pnand %p118, %p119
      %p121 = pneg %p120
      // Predicated region
      $region9: #{dino_forward.2} parent=5 // pred_check
        _
      $region10: #{dino_forward.2} parent=5 // pred_check_branch
        %123 = sbr.rel (%p120) target = $region12
      $region11: #{dino_forward.2} parent=5 // pred_region
        %s124 = ssub.s32 %s16, 1
        // Predicated region
        $region13: #{dino_forward.2} parent=11 // pred_check
          %p125 = pneg %p63
        $region14: #{dino_forward.2} parent=11 // pred_check_branch
          %127 = sbr.rel (%p125) target = $region16
        $region15: #{dino_forward.2} parent=11 // pred_region
          _
        $region16: #{dino_forward.2} parent=11 // pred_fallthru
          _
      $region12: #{dino_forward.2} parent=5 // pred_fallthru
        _
      %p128 = scmp.lt.s32.totalorder %s16, 2
      // Predicated region
      $region17: #{dino_forward.2} parent=5 // pred_check
        %p129 = pneg %p128
      $region18: #{dino_forward.2} parent=5 // pred_check_branch
        %131 = sbr.rel (%p129) target = $region20
      $region19: #{dino_forward.2} parent=5 // pred_region
        // Predicated region
        $region21: #{dino_forward.2} parent=19 // pred_check
          %p132 = pneg %p36
        $region22: #{dino_forward.2} parent=19 // pred_check_branch
          %134 = sbr.rel (%p132) target = $region24
        $region23: #{dino_forward.2} parent=19 // pred_region
          %s135 = sand.u32 %s26, 1
          %s136 = scalar_lea.sflag [#allocation5], %s135
          %s137 = sand.u32 %s26, 1
          %s138 = smul.addr %s137, 32
          %s139 = scalar_lea.vmem [#allocation4], %s138
          %s140 = smul.u32 2, %s16
          %s142 = ssub.s32 512, 512
          %143 = vsyncadd %s136, %s142
          %s144 = smul.addr %s140, 2
          %s145 = smul.addr %s144, 128
          %s146 = scalar_lea.hbm %s1, %s145
          %s147 = sshll.u32 %s139, 4
          %s148 = int_to_ptr.vmem [resolvable:$true] %s147
          %153 = dma.hbm_to_vmem [thread:$0]  %s146, 512, %s148, %s136, 256, 256, 16
        $region24: #{dino_forward.2} parent=19 // pred_fallthru
          _
      $region20: #{dino_forward.2} parent=5 // pred_fallthru
        _
      %p154 = scmp.le.s32.totalorder 1, %s16
      %p155 = scmp.lt.s32.totalorder %s16, 3
      %p156 = pnand %p154, %p155
      %p157 = pneg %p156
      // Predicated region
      $region25: #{dino_forward.2} parent=5 // pred_check
        _
      $region26: #{dino_forward.2} parent=5 // pred_check_branch
        %159 = sbr.rel (%p156) target = $region28
      $region27: #{dino_forward.2} parent=5 // pred_region
        %s160 = ssub.s32 %s16, 1
        %s161 = sand.u32 %s29, 1
        %s162 = scalar_lea.sflag [#allocation5], %s161
        %s163 = sand.u32 %s29, 1
        %s164 = smul.addr %s163, 32
        %s165 = scalar_lea.vmem [#allocation4], %s164
        // Predicated region
        $region29: #{dino_forward.2} parent=27 // pred_check
          %p166 = pneg %p42
        $region30: #{dino_forward.2} parent=27 // pred_check_branch
          %168 = sbr.rel (%p166) target = $region32
        $region31: #{dino_forward.2} parent=27 // pred_region
          %169 = dma.done %s162, 512
        $region32: #{dino_forward.2} parent=27 // pred_fallthru
          _
        %s170 = sand.u32 %s29, 1
        %s171 = scalar_lea.sflag [#allocation5], %s170
        %s172 = sand.u32 %s29, 1
        %s173 = smul.addr %s172, 32
        %s174 = scalar_lea.vmem [#allocation4], %s173
        %p175 = pneg %p42
        %p176 = pneg %p39
        %p177 = pneg %p63
        %p178 = pneg %p60
        %p179 = pneg %p89
        %p180 = pneg %p86
        %s181 = smul.u32 2, %s21
        %p182 = scmp.lt.s32.totalorder %s181, 3
        %s183 = scalar_select %p182, %s181, 3
        %s184 = smul.addr %s183, 2
        %s185 = smul.addr %s184, 4
        %s186 = scalar_lea.vmem %s3, %s185
        %p187 = pneg %p110
        %p188 = pneg %p107
        %s189 = smul.u32 2, %s21
        %s190 = smul.u32 2, %s21
        %p191 = scmp.lt.s32.totalorder %s190, 3
        %s192 = scalar_select %p191, %s190, 3
        %s193 = smul.addr %s192, 2
        %s194 = smul.addr %s193, 4
        %s195 = scalar_lea.vmem %s3, %s194
        %s196 = smul.u32 2, %s21
        %v197 = vld [vmem:[%s165] sm:$0xff]
        %v198 = vld [vmem:[%s165 + $0x8] sm:$0xff]
        %v199 = vld [vmem:[%s165 + $0x10] sm:$0xff]
        %v200 = vld [vmem:[%s165 + $0x18] sm:$0xff]
        %p201 = scmp.eq.s32.totalorder %s21, 0
        // Predicated region
        $region33: #{dino_forward.2} parent=27 // pred_check
          %p202 = pneg %p201
        $region34: #{dino_forward.2} parent=27 // pred_check_branch
          %204 = sbr.rel (%p202) target = $region36
        $region35: #{dino_forward.2} parent=27 // pred_region
          %v205 = vlaneseq
          %vm206 = vcmp.ge.s32.totalorder %v205, 0
          %vm207 = vcmp.lt.s32.totalorder %v205, 256
          %vm208 = vmand %vm206, %vm207
          %209 = vst.msk [vmem:[#allocation7] sm:$0x3] %vm208, 0.0
        $region36: #{dino_forward.2} parent=27 // pred_fallthru
          _
        %v210 = vld [vmem:[#allocation7] sm:$0x3]
        %v211 = vadd.f32 %v197, %v199
        %v212 = vrot.slane %v211, 4
        %v213 = vadd.f32 %v211, %v212
        %v214 = vrot.slane %v213, 2
        %v215 = vadd.f32 %v213, %v214
        %v216 = vrot.slane %v215, 1
        %v217 = vadd.f32 %v215, %v216
        %v218 = vadd.f32 %v198, %v200
        %v219 = vrot.slane %v218, 4
        %v220 = vadd.f32 %v218, %v219
        %v221 = vrot.slane %v220, 2
        %v222 = vadd.f32 %v220, %v221
        %v223 = vrot.slane %v222, 1
        %v224 = vadd.f32 %v222, %v223
        %v227 = vcombine.low %v217, %v224
        %v229 = vunpack.c.l.s4 1966171168
        %v230 = vunpack.c.0.s8 %v229
        %v231 = vlaneseq
        %v232 = vshrl.u32 %v231, 7
        %v233 = vsub.s32 %v230, %v232
        %v234 = vrot.slane %v227, %v233
        %v236 = vunpack.c.l.s4 1966171168
        %v237 = vunpack.c.0.s8 %v236
        %v238 = vlaneseq
        %v239 = vshrl.u32 %v238, 7
        %v240 = vsub.s32 %v237, %v239
        %v241 = vrot.slane %v234, %v240
        %v243 = vadd.f32 %v210, %v241
        %v244 = vlaneseq
        %vm245 = vcmp.ge.s32.totalorder %v244, 0
        %vm246 = vcmp.lt.s32.totalorder %v244, 256
        %vm247 = vmand %vm245, %vm246
        %248 = vst.msk [vmem:[#allocation7] sm:$0x3] %vm247, %v243
        %s249 = sld [smem:[#allocation3]]
        %v250 = vld [vmem:[%s2] sm:$0x3]
        %v252 = vlaneseq
        %v253 = vshrl.u32 %v252, 7
        %v254 = vsub.s32 0, %v253
        %v255 = vrot.slane %v250, %v254
        %v256 = vlaneseq
        %v257 = vshrl.u32 %v256, 7
        %v258 = vsub.s32 1, %v257
        %v259 = vrot.slane %v250, %v258
        %v262 = vsub.f32 %v197, %v255
        %v263 = vsub.f32 %v198, %v259
        %v264 = vsub.f32 %v199, %v255
        %v265 = vsub.f32 %v200, %v259
        %v266 = vstv %s249
        %v267 = vmul.f32 %v262, %v266
        %v268 = vmul.f32 %v263, %v266
        %v269 = vmul.f32 %v264, %v266
        %v270 = vmul.f32 %v265, %v266
        %v271 = vmax.f32 %v267, %v268
        %272 = vmax.xlane.f32.xlu0 %v271
        %v273 = vpop.xlane.xlu0 %272
        %v274 = vmax.f32 %v269, %v270
        %275 = vmax.xlane.f32.xlu0 %v274
        %v276 = vpop.xlane.xlu0 %275
        %v277 = vsub.f32 %v267, %v273
        %v278 = vsub.f32 %v268, %v273
        %v279 = vsub.f32 %v269, %v276
        %v280 = vsub.f32 %v270, %v276
        %v281 = vmul.f32 %v277, 1.442695
        %v282 = vpow.pop %v281
        %v283 = vmul.f32 %v278, 1.442695
        %v284 = vpow.pop %v283
        %v285 = vmul.f32 %v279, 1.442695
        %v286 = vpow.pop %v285
        %v287 = vmul.f32 %v280, 1.442695
        %v288 = vpow.pop %v287
        %v289 = vadd.f32 %v282, %v284
        %290 = vadd.xlane.f32.xlu0 %v289
        %v291 = vpop.xlane.xlu0 %290
        %v292 = vadd.f32 %v286, %v288
        %293 = vadd.xlane.f32.xlu0 %v292
        %v294 = vpop.xlane.xlu0 %293
        %v295 = vrcp.pop %v291
        %v296 = vrcp.pop %v294
        %v297 = vmul.f32 %v282, %v295
        %v298 = vmul.f32 %v284, %v295
        %v299 = vmul.f32 %v286, %v296
        %v300 = vmul.f32 %v288, %v296
        %v301 = vpack.c.bf16 %v299, %v297
        %v302 = vpack.c.bf16 %v300, %v298
        %v305 = vunpack.c.l.b16 %v301
        %v306 = vunpack.c.l.b16 %v302
        %v307 = vunpack.c.h.b16 %v301
        %v308 = vunpack.c.h.b16 %v302
        %v309 = vpack.c.b16 %v306, %v305
        %v310 = vpack.c.b16 %v308, %v307
        %313 = vst [vmem:[%s195] sm:$0xff] %v309
        %314 = vst [vmem:[%s195 + $0x8] sm:$0xff] %v310
        %s315 = smul.u32 2, %s21
        %p316 = scmp.lt.s32.totalorder %s315, 3
        %s317 = scalar_select %p316, %s315, 3
        %s318 = smul.addr %s317, 2
        %s319 = smul.addr %s318, 4
        %s320 = scalar_lea.vmem %s3, %s319
        // Predicated region
        $region37: #{dino_forward.2} parent=27 // pred_check
          %p321 = pneg %p86
        $region38: #{dino_forward.2} parent=27 // pred_check_branch
          %323 = sbr.rel (%p321) target = $region40
        $region39: #{dino_forward.2} parent=27 // pred_region
          %s324 = smul.u32 2, %s21
        $region40: #{dino_forward.2} parent=27 // pred_fallthru
          _
        // Predicated region
        $region41: #{dino_forward.2} parent=27 // pred_check
          %p325 = pneg %p107
        $region42: #{dino_forward.2} parent=27 // pred_check_branch
          %327 = sbr.rel (%p325) target = $region44
        $region43: #{dino_forward.2} parent=27 // pred_region
          %s329 = ssub.s32 32, 32
          %330 = vsyncadd [#allocation6], %s329
          %s332 = sshll.u32 [#allocation7], 4
          %s333 = int_to_ptr.vmem [resolvable:$true] %s332
          %335 = dma.vmem_to_hbm [thread:$0]  %s333, 32, %s4, [#allocation6]
        $region44: #{dino_forward.2} parent=27 // pred_fallthru
          _
        // Predicated region
        $region45: #{dino_forward.2} parent=27 // pred_check
          %p336 = pneg %p107
        $region46: #{dino_forward.2} parent=27 // pred_check_branch
          %338 = sbr.rel (%p336) target = $region48
        $region47: #{dino_forward.2} parent=27 // pred_region
          %339 = dma.done [#allocation6], 32
        $region48: #{dino_forward.2} parent=27 // pred_fallthru
          _
      $region28: #{dino_forward.2} parent=5 // pred_fallthru
        _
      %p340 = scmp.le.s32.totalorder 2, %s16
      // Predicated region
      $region49: #{dino_forward.2} parent=5 // pred_check
        %p341 = pneg %p340
      $region50: #{dino_forward.2} parent=5 // pred_check_branch
        %343 = sbr.rel (%p341) target = $region52
      $region51: #{dino_forward.2} parent=5 // pred_region
        %s344 = ssub.s32 %s16, 2
        // Predicated region
        $region53: #{dino_forward.2} parent=51 // pred_check
          %p345 = pneg %p92
        $region54: #{dino_forward.2} parent=51 // pred_check_branch
          %347 = sbr.rel (%p345) target = $region56
        $region55: #{dino_forward.2} parent=51 // pred_region
          %s348 = smul.u32 2, %s22
          %p349 = scmp.lt.s32.totalorder %s348, 3
          %s350 = scalar_select %p349, %s348, 3
          %s351 = smul.addr %s350, 2
          %s352 = smul.addr %s351, 4
          %s353 = scalar_lea.vmem %s3, %s352
        $region56: #{dino_forward.2} parent=51 // pred_fallthru
          _
      $region52: #{dino_forward.2} parent=5 // pred_fallthru
        _
    $region6: #{dino_forward.2} parent=1 // loop_footer
      %s20 = sadd.s32 1, %s16
    $region7: #{dino_forward.2} parent=1 // loop_footer_branch
      %15 = sbr.rel target = $region3
    $region8: #{dino_forward.2} parent=1 // loop_exit
      _
    %354 = vsyncpa [#allocation5], 1
    %s355 = scalar_lea.sflag [#allocation5], 1
    %356 = vsyncpa %s355, 1
    %357 = vsyncpa [#allocation6], 1
    %s358 = scalar_lea.sflag [#allocation6], 1
    %359 = vsyncpa %s358, 1

</llo_original>
